<compile_context>
chip_gen: v7x
topology: tpu7x:2x2x1
jax: 0.10.0
libtpu: 0.0.40
codegen_flags: <defaults>
</compile_context>

<pallas_src>
import functools

import jax
import jax.numpy as jnp
from jax.experimental import pallas as pl
from jax.experimental.pallas import tpu as pltpu

LANES = 128  # lane width / logits slab width


def _round_up(x, m):
    return ((x + m - 1) // m) * m


def bow_kernel(im_ref, emb_ref, wstack_ref, ball_ref, out_ref, *, TB, Pp, Hp):
    """One batch tile of TB examples.

    im_ref:     (TB*(Pp+Hp), 2) int32  -- col 0 = token id, col 1 = mask (0/1)
    emb_ref:    (Vp, Fp)        bf16   -- lane-padded embedding table
    wstack_ref: (6, Fp, Fp)     bf16   -- [W_rot, W1_top, W1_bot, W2, W3, W_out]
    ball_ref:   (5, Fp)         f32    -- [b_rot, b1, b2, b3, b_out(-1e30 pads)]
    out_ref:    (TB, Fp)        f32    -- log-softmax slab (pad lanes ~ -1e30)
    """
    Nt = im_ref.shape[0]
    Vp = emb_ref.shape[0]
    Fp = emb_ref.shape[1]
    f32 = jnp.float32
    bf16 = jnp.bfloat16

    ids = im_ref[:, 0:1]                               # (Nt, 1) int32
    mask = im_ref[:, 1:2].astype(f32)                  # (Nt, 1) f32 (VPU stays f32)

    # ---- in-kernel embedding lookup as a one-hot (bf16) matmul on the MXU ----
    iota = jax.lax.broadcasted_iota(jnp.int32, (Nt, Vp), 1)
    onehot = (iota == ids).astype(bf16)                # exact 0/1 in bf16
    embed = jnp.dot(onehot, emb_ref[...], preferred_element_type=f32)   # (Nt, Fp)

    # ---- fused rotation Linear + ReLU for premise AND hypothesis tokens ------
    z = jnp.maximum(
        jnp.dot(embed.astype(bf16), wstack_ref[0], preferred_element_type=f32)
        + ball_ref[0:1, :], 0.0)
    # mask AFTER bias+ReLU (pad token rows see a real bias; mask zeros them here)
    z = z * mask                                        # (Nt, Fp) f32

    # ---- masked sum-pool over the token axis (token dims padded to x8) -------
    np_rows = TB * Pp
    pooled_p = jnp.sum(z[:np_rows].reshape(TB, Pp, Fp), axis=1)   # (TB, Fp)
    pooled_h = jnp.sum(z[np_rows:].reshape(TB, Hp, Fp), axis=1)   # (TB, Fp)

    # ---- MLP: concat([p, h]) @ W1 == p @ W1_top + h @ W1_bot (no lane concat)
    h = jnp.maximum(
        jnp.dot(pooled_p.astype(bf16), wstack_ref[1], preferred_element_type=f32)
        + jnp.dot(pooled_h.astype(bf16), wstack_ref[2], preferred_element_type=f32)
        + ball_ref[1:2, :], 0.0)
    h = jnp.maximum(
        jnp.dot(h.astype(bf16), wstack_ref[3], preferred_element_type=f32)
        + ball_ref[2:3, :], 0.0)
    h = jnp.maximum(
        jnp.dot(h.astype(bf16), wstack_ref[4], preferred_element_type=f32)
        + ball_ref[3:4, :], 0.0)

    # ---- output projection into a lane-dense slab + LogSoftmax ---------------
    # Invariant: wstack[5] pad columns are exactly zero and ball[4] pad lanes are
    # -1e30 (kept in f32), so pad lanes never win the max and exp() underflows
    # to 0; they do not perturb the normalizer.
    logits = (jnp.dot(h.astype(bf16), wstack_ref[5], preferred_element_type=f32)
              + ball_ref[4:5, :])                       # (TB, Fp)
    m = jnp.max(logits, axis=1, keepdims=True)
    lse = jnp.log(jnp.sum(jnp.exp(logits - m), axis=1, keepdims=True)) + m
    out_ref[...] = logits - lse


def bow_forward(params, word_mat, prem_ids, prem_mask, hypo_ids, hypo_mask,
                *, batch_tile=8):
    f32, bf16 = jnp.float32, jnp.bfloat16
    B, P = prem_ids.shape
    _, Hh = hypo_ids.shape
    V = word_mat.shape[0]
    D, H = params['W_rot'].shape            # word_vec_size, hidden_size
    Hm = params['W1'].shape[0]              # 2 * hidden_size
    nclass = params['W_out'].shape[1]
    assert 2 * H == Hm

    TB = batch_tile                          # multiple of 8 -> unmasked vst
    B_pad = _round_up(B, TB)
    n_tiles = B_pad // TB
    Pp, Hp = _round_up(P, 8), _round_up(Hh, 8)      # sublane-align token dims
    Vp = _round_up(V, LANES)                        # lane-align vocab
    Fp = _round_up(max(D, Hm), LANES)               # lane-dense feature width
    assert nclass <= Fp

    # ---- pack ids + mask into ONE (N, 2) int32 operand, grouped per batch tile
    def pad_bt(x, Tp):
        T = x.shape[1]
        return jnp.pad(x.astype(jnp.int32), ((0, B_pad - B), (0, Tp - T)))

    pid, pmk = pad_bt(prem_ids, Pp), pad_bt(prem_mask, Pp)
    hid, hmk = pad_bt(hypo_ids, Hp), pad_bt(hypo_mask, Hp)

    def tile_pack(p, h):
        # rows within tile i: [premise tokens of its TB examples, hypo tokens]
        p_t = p.reshape(n_tiles, TB * Pp)
        h_t = h.reshape(n_tiles, TB * Hp)
        return jnp.concatenate([p_t, h_t], axis=1).reshape(-1)

    ids_mask = jnp.stack([tile_pack(pid, hid), tile_pack(pmk, hmk)], axis=1)

    # ---- bf16 embedding table + weight stack (lane-padded), f32 bias stack ---
    emb_pad = jnp.zeros((Vp, Fp), bf16).at[:V, :D].set(word_mat.astype(bf16))

    def sq(w, r, c):
        return jnp.zeros((Fp, Fp), bf16).at[:r, :c].set(w.astype(bf16))

    w1 = params['W1']
    w_stack = jnp.stack([
        sq(params['W_rot'], D, H),     # rotation
        sq(w1[:H], H, Hm),             # W1 top half  (premise part of concat)
        sq(w1[H:], H, Hm),             # W1 bottom half (hypothesis part)
        sq(params['W2'], Hm, Hm),
        sq(params['W3'], Hm, Hm),
        sq(params['W_out'], Hm, nclass),
    ], axis=0)                                              # (6, Fp, Fp) bf16

    b_all = (jnp.zeros((5, Fp), f32)
             .at[0, :H].set(params['b_rot'].reshape(-1).astype(f32))
             .at[1, :Hm].set(params['b1'].reshape(-1).astype(f32))
             .at[2, :Hm].set(params['b2'].reshape(-1).astype(f32))
             .at[3, :Hm].set(params['b3'].reshape(-1).astype(f32))
             .at[4].set(jnp.full((Fp,), -1e30, f32))
             .at[4, :nclass].set(params['b_out'].reshape(-1).astype(f32)))

    Nt = TB * (Pp + Hp)
    out_pad = pl.pallas_call(
        functools.partial(bow_kernel, TB=TB, Pp=Pp, Hp=Hp),
        out_shape=jax.ShapeDtypeStruct((B_pad, Fp), f32),
        grid=(n_tiles,),
        in_specs=[
            pl.BlockSpec((Nt, 2), lambda i: (i, 0)),           # batch-tiled tokens
            pl.BlockSpec((Vp, Fp), lambda i: (0, 0)),          # weights: constant
            pl.BlockSpec((6, Fp, Fp), lambda i: (0, 0, 0)),    #   block index ->
            pl.BlockSpec((5, Fp), lambda i: (0, 0)),           #   VMEM-resident
        ],
        out_specs=pl.BlockSpec((TB, Fp), lambda i: (i, 0)),
        compiler_params=pltpu.CompilerParams(
            dimension_semantics=("parallel",),       # shard batch tiles over TCs
            vmem_limit_bytes=32 * 1024 * 1024),      # sized for v7x scoped VMEM
    )(ids_mask, emb_pad, w_stack, b_all)
    return out_pad[:B, :nclass]


# ----------------------------- references -----------------------------------
def bow_reference_f32(params, word_mat, prem_ids, prem_mask, hypo_ids, hypo_mask):
    """Pure-f32 reference matching the PyTorch module semantics."""
    def encode(ids, mask):
        vecs = word_mat[ids]                                             # (B,T,D)
        z = jnp.maximum(vecs @ params['W_rot'] + params['b_rot'], 0.0)   # (B,T,H)
        z = z * mask[..., None].astype(jnp.float32)
        return jnp.sum(z, axis=-2)                                       # (B,H)
    x = jnp.concatenate([encode(prem_ids, prem_mask),
                         encode(hypo_ids, hypo_mask)], axis=-1)
    h = jnp.maximum(x @ params['W1'] + params['b1'], 0.0)
    h = jnp.maximum(h @ params['W2'] + params['b2'], 0.0)
    h = jnp.maximum(h @ params['W3'] + params['b3'], 0.0)
    logits = h @ params['W_out'] + params['b_out']
    return jax.nn.log_softmax(logits, axis=1)


def bow_reference_bf16(params, word_mat, prem_ids, prem_mask, hypo_ids, hypo_mask):
    """Emulates the kernel's bf16 MXU operands + f32 accumulation (tight check)."""
    f32, bf16 = jnp.float32, jnp.bfloat16
    H = params['W_rot'].shape[1]

    def mm(a, w):
        return jnp.dot(a.astype(bf16), w.astype(bf16), preferred_element_type=f32)

    def encode(ids, mask):
        vecs = word_mat.astype(bf16).astype(f32)[ids]
        z = jnp.maximum(mm(vecs, params['W_rot']) + params['b_rot'].astype(f32), 0.0)
        z = z * mask[..., None].astype(f32)
        return jnp.sum(z, axis=-2)

    p = encode(prem_ids, prem_mask)
    q = encode(hypo_ids, hypo_mask)
    w1 = params['W1']
    x = jnp.maximum(mm(p, w1[:H]) + mm(q, w1[H:]) + params['b1'].astype(f32), 0.0)
    x = jnp.maximum(mm(x, params['W2']) + params['b2'].astype(f32), 0.0)
    x = jnp.maximum(mm(x, params['W3']) + params['b3'].astype(f32), 0.0)
    logits = mm(x, params['W_out']) + params['b_out'].astype(f32)
    return jax.nn.log_softmax(logits, axis=1)


if __name__ == "__main__":
    # Small, deterministic configuration consistent with BOWModel.__init__
    vocab = 50
    word_vec_size = 32
    hidden_size = 32          # -> MLP width 2*hidden_size = 64
    num_classes = 3           # len(EntailmentLabels)
    B, P, Hh = 2, 8, 6        # batch, premise length, hypothesis length

    key = jax.random.PRNGKey(0)
    ks = jax.random.split(key, 12)

    word_mat = jax.random.normal(ks[0], (vocab, word_vec_size), jnp.float32) * 0.5
    params = {
        'W_rot': jax.random.normal(ks[1], (word_vec_size, hidden_size), jnp.float32) * 0.1,
        'b_rot': jax.random.normal(ks[2], (1, hidden_size), jnp.float32) * 0.1,
        'W1': jax.random.normal(ks[3], (2 * hidden_size, 2 * hidden_size), jnp.float32) * 0.1,
        'b1': jax.random.normal(ks[4], (1, 2 * hidden_size), jnp.float32) * 0.1,
        'W2': jax.random.normal(ks[5], (2 * hidden_size, 2 * hidden_size), jnp.float32) * 0.1,
        'b2': jax.random.normal(ks[6], (1, 2 * hidden_size), jnp.float32) * 0.1,
        'W3': jax.random.normal(ks[7], (2 * hidden_size, 2 * hidden_size), jnp.float32) * 0.1,
        'b3': jax.random.normal(ks[8], (1, 2 * hidden_size), jnp.float32) * 0.1,
        'W_out': jax.random.normal(ks[9], (2 * hidden_size, num_classes), jnp.float32) * 0.1,
        'b_out': jax.random.normal(ks[10], (1, num_classes), jnp.float32) * 0.1,
    }

    prem_ids = jax.random.randint(ks[11], (B, P), 0, vocab)
    hypo_ids = jax.random.randint(jax.random.PRNGKey(1), (B, Hh), 0, vocab)
    # binary masks (1 for real tokens, 0 for pad)
    prem_lengths = jnp.array([P, 5])
    hypo_lengths = jnp.array([Hh, 4])
    prem_mask = (jnp.arange(P)[None, :] < prem_lengths[:, None]).astype(jnp.float32)
    hypo_mask = (jnp.arange(Hh)[None, :] < hypo_lengths[:, None]).astype(jnp.float32)

    out = bow_forward(params, word_mat, prem_ids, prem_mask, hypo_ids, hypo_mask)
    out = jax.block_until_ready(out)
    assert out.shape == (B, num_classes)

    # Tight check vs a reference that emulates the kernel's bf16 operand path.
    ref_bf16 = bow_reference_bf16(params, word_mat, prem_ids, prem_mask,
                                  hypo_ids, hypo_mask)
    assert jnp.allclose(out, ref_bf16, atol=1e-2, rtol=1e-2), (out, ref_bf16)

    # Looser semantic check vs the pure-f32 module reference (bf16 quantization
    # of weights/activations bounds the gap).
    ref_f32 = bow_reference_f32(params, word_mat, prem_ids, prem_mask,
                                hypo_ids, hypo_mask)
    assert jnp.allclose(out, ref_f32, atol=1.5e-1, rtol=1.5e-1), (out, ref_f32)
    assert jnp.array_equal(jnp.argmax(out, axis=1), jnp.argmax(ref_f32, axis=1))

    print("KERNEL_OK")
</pallas_src>

<mosaic_0001>
module attributes {stable_mosaic.version = 11 : i64} {
  func.func @bow_kernel(%arg0: i32, %arg1: memref<128x2xi32, #tpu.memory_space<vmem>>, %arg2: memref<128x128xbf16, #tpu.memory_space<vmem>>, %arg3: memref<6x128x128xbf16, #tpu.memory_space<vmem>>, %arg4: memref<5x128xf32, #tpu.memory_space<vmem>>, %arg5: memref<8x128xf32, #tpu.memory_space<vmem>>) attributes {dimension_semantics = [#tpu.dimension_semantics<parallel>], iteration_bounds = array<i64: 1>, scalar_prefetch = 0 : i64, scratch_operands = 0 : i64, tpu.core_type = #tpu.core_type<tc>, window_params = [{transform_indices = @transform_0, window_bounds = array<i64: 128, 2>}, {pipeline_mode = #tpu.pipeline_mode<synchronous>, transform_indices = @transform_1, window_bounds = array<i64: 128, 128>}, {pipeline_mode = #tpu.pipeline_mode<synchronous>, transform_indices = @transform_2, window_bounds = array<i64: 6, 128, 128>}, {pipeline_mode = #tpu.pipeline_mode<synchronous>, transform_indices = @transform_3, window_bounds = array<i64: 5, 128>}, {transform_indices = @transform_4, window_bounds = array<i64: 8, 128>}]} {
    %c0 = arith.constant 0 : index
    %c0_0 = arith.constant 0 : index
    %0 = vector.load %arg1[%c0, %c0_0] : memref<128x2xi32, #tpu.memory_space<vmem>>, vector<128x1xi32>
    %c0_1 = arith.constant 0 : index
    %c1 = arith.constant 1 : index
    %1 = vector.load %arg1[%c0_1, %c1] : memref<128x2xi32, #tpu.memory_space<vmem>>, vector<128x1xi32>
    %2 = arith.sitofp %1 : vector<128x1xi32> to vector<128x1xf32>
    %3 = tpu.iota {dimensions = array<i32: 1>} : vector<128x128xi32>
    %4 = vector.broadcast %0 : vector<128x1xi32> to vector<128x128xi32>
    %5 = arith.cmpi eq, %3, %4 : vector<128x128xi32>
    %6 = arith.extui %5 : vector<128x128xi1> to vector<128x128xi32>
    %7 = arith.sitofp %6 : vector<128x128xi32> to vector<128x128xf32>
    %8 = arith.truncf %7 : vector<128x128xf32> to vector<128x128xbf16>
    %c0_2 = arith.constant 0 : index
    %c0_3 = arith.constant 0 : index
    %9 = vector.load %arg2[%c0_2, %c0_3] : memref<128x128xbf16, #tpu.memory_space<vmem>>, vector<128x128xbf16>
    %cst = arith.constant dense<0.000000e+00> : vector<128x128xf32>
    %10 = tpu.matmul %8, %9, %cst {dimension_numbers = #tpu.dot_dimension_numbers<[1], [0], [0], [1], [0, 0, 1, 1], [], []>} : vector<128x128xbf16>, vector<128x128xbf16>, vector<128x128xf32> -> vector<128x128xf32>
    %11 = arith.truncf %10 : vector<128x128xf32> to vector<128x128xbf16>
    %c0_4 = arith.constant 0 : index
    %c0_5 = arith.constant 0 : index
    %c0_6 = arith.constant 0 : index
    %12 = vector.load %arg3[%c0_4, %c0_5, %c0_6] : memref<6x128x128xbf16, #tpu.memory_space<vmem>>, vector<1x128x128xbf16>
    %13 = vector.shape_cast %12 : vector<1x128x128xbf16> to vector<128x128xbf16>
    %cst_7 = arith.constant dense<0.000000e+00> : vector<128x128xf32>
    %14 = tpu.matmul %11, %13, %cst_7 {dimension_numbers = #tpu.dot_dimension_numbers<[1], [0], [0], [1], [0, 0, 1, 1], [], []>} : vector<128x128xbf16>, vector<128x128xbf16>, vector<128x128xf32> -> vector<128x128xf32>
    %c0_8 = arith.constant 0 : index
    %c0_9 = arith.constant 0 : index
    %15 = vector.load %arg4[%c0_8, %c0_9] : memref<5x128xf32, #tpu.memory_space<vmem>>, vector<1x128xf32>
    %16 = vector.broadcast %15 : vector<1x128xf32> to vector<128x128xf32>
    %17 = arith.addf %14, %16 : vector<128x128xf32>
    %cst_10 = arith.constant 0.000000e+00 : f32
    %18 = vector.broadcast %cst_10 : f32 to vector<128x128xf32>
    %19 = arith.maximumf %17, %18 : vector<128x128xf32>
    %20 = vector.broadcast %2 : vector<128x1xf32> to vector<128x128xf32>
    %21 = arith.mulf %19, %20 : vector<128x128xf32>
    %22 = vector.extract_strided_slice %21 {offsets = [0, 0], sizes = [64, 128], strides = [1, 1]} : vector<128x128xf32> to vector<64x128xf32>
    %23 = vector.shape_cast %22 : vector<64x128xf32> to vector<8x8x128xf32>
    %cst_11 = arith.constant dense<0.000000e+00> : vector<8x128xf32>
    %24 = vector.multi_reduction <add>, %23, %cst_11 [1] : vector<8x8x128xf32> to vector<8x128xf32>
    %25 = vector.extract_strided_slice %21 {offsets = [64, 0], sizes = [64, 128], strides = [1, 1]} : vector<128x128xf32> to vector<64x128xf32>
    %26 = vector.shape_cast %25 : vector<64x128xf32> to vector<8x8x128xf32>
    %cst_12 = arith.constant dense<0.000000e+00> : vector<8x128xf32>
    %27 = vector.multi_reduction <add>, %26, %cst_12 [1] : vector<8x8x128xf32> to vector<8x128xf32>
    %28 = arith.truncf %24 : vector<8x128xf32> to vector<8x128xbf16>
    %c1_13 = arith.constant 1 : index
    %c0_14 = arith.constant 0 : index
    %c0_15 = arith.constant 0 : index
    %29 = vector.load %arg3[%c1_13, %c0_14, %c0_15] : memref<6x128x128xbf16, #tpu.memory_space<vmem>>, vector<1x128x128xbf16>
    %30 = vector.shape_cast %29 : vector<1x128x128xbf16> to vector<128x128xbf16>
    %cst_16 = arith.constant dense<0.000000e+00> : vector<8x128xf32>
    %31 = tpu.matmul %28, %30, %cst_16 {dimension_numbers = #tpu.dot_dimension_numbers<[1], [0], [0], [1], [0, 0, 1, 1], [], []>} : vector<8x128xbf16>, vector<128x128xbf16>, vector<8x128xf32> -> vector<8x128xf32>
    %32 = arith.truncf %27 : vector<8x128xf32> to vector<8x128xbf16>
    %c2 = arith.constant 2 : index
    %c0_17 = arith.constant 0 : index
    %c0_18 = arith.constant 0 : index
    %33 = vector.load %arg3[%c2, %c0_17, %c0_18] : memref<6x128x128xbf16, #tpu.memory_space<vmem>>, vector<1x128x128xbf16>
    %34 = vector.shape_cast %33 : vector<1x128x128xbf16> to vector<128x128xbf16>
    %cst_19 = arith.constant dense<0.000000e+00> : vector<8x128xf32>
    %35 = tpu.matmul %32, %34, %cst_19 {dimension_numbers = #tpu.dot_dimension_numbers<[1], [0], [0], [1], [0, 0, 1, 1], [], []>} : vector<8x128xbf16>, vector<128x128xbf16>, vector<8x128xf32> -> vector<8x128xf32>
    %36 = arith.addf %31, %35 : vector<8x128xf32>
    %c1_20 = arith.constant 1 : index
    %c0_21 = arith.constant 0 : index
    %37 = vector.load %arg4[%c1_20, %c0_21] : memref<5x128xf32, #tpu.memory_space<vmem>>, vector<1x128xf32>
    %38 = vector.broadcast %37 : vector<1x128xf32> to vector<8x128xf32>
    %39 = arith.addf %36, %38 : vector<8x128xf32>
    %cst_22 = arith.constant 0.000000e+00 : f32
    %40 = vector.broadcast %cst_22 : f32 to vector<8x128xf32>
    %41 = arith.maximumf %39, %40 : vector<8x128xf32>
    %42 = arith.truncf %41 : vector<8x128xf32> to vector<8x128xbf16>
    %c3 = arith.constant 3 : index
    %c0_23 = arith.constant 0 : index
    %c0_24 = arith.constant 0 : index
    %43 = vector.load %arg3[%c3, %c0_23, %c0_24] : memref<6x128x128xbf16, #tpu.memory_space<vmem>>, vector<1x128x128xbf16>
    %44 = vector.shape_cast %43 : vector<1x128x128xbf16> to vector<128x128xbf16>
    %cst_25 = arith.constant dense<0.000000e+00> : vector<8x128xf32>
    %45 = tpu.matmul %42, %44, %cst_25 {dimension_numbers = #tpu.dot_dimension_numbers<[1], [0], [0], [1], [0, 0, 1, 1], [], []>} : vector<8x128xbf16>, vector<128x128xbf16>, vector<8x128xf32> -> vector<8x128xf32>
    %c2_26 = arith.constant 2 : index
    %c0_27 = arith.constant 0 : index
    %46 = vector.load %arg4[%c2_26, %c0_27] : memref<5x128xf32, #tpu.memory_space<vmem>>, vector<1x128xf32>
    %47 = vector.broadcast %46 : vector<1x128xf32> to vector<8x128xf32>
    %48 = arith.addf %45, %47 : vector<8x128xf32>
    %cst_28 = arith.constant 0.000000e+00 : f32
    %49 = vector.broadcast %cst_28 : f32 to vector<8x128xf32>
    %50 = arith.maximumf %48, %49 : vector<8x128xf32>
    %51 = arith.truncf %50 : vector<8x128xf32> to vector<8x128xbf16>
    %c4 = arith.constant 4 : index
    %c0_29 = arith.constant 0 : index
    %c0_30 = arith.constant 0 : index
    %52 = vector.load %arg3[%c4, %c0_29, %c0_30] : memref<6x128x128xbf16, #tpu.memory_space<vmem>>, vector<1x128x128xbf16>
    %53 = vector.shape_cast %52 : vector<1x128x128xbf16> to vector<128x128xbf16>
    %cst_31 = arith.constant dense<0.000000e+00> : vector<8x128xf32>
    %54 = tpu.matmul %51, %53, %cst_31 {dimension_numbers = #tpu.dot_dimension_numbers<[1], [0], [0], [1], [0, 0, 1, 1], [], []>} : vector<8x128xbf16>, vector<128x128xbf16>, vector<8x128xf32> -> vector<8x128xf32>
    %c3_32 = arith.constant 3 : index
    %c0_33 = arith.constant 0 : index
    %55 = vector.load %arg4[%c3_32, %c0_33] : memref<5x128xf32, #tpu.memory_space<vmem>>, vector<1x128xf32>
    %56 = vector.broadcast %55 : vector<1x128xf32> to vector<8x128xf32>
    %57 = arith.addf %54, %56 : vector<8x128xf32>
    %cst_34 = arith.constant 0.000000e+00 : f32
    %58 = vector.broadcast %cst_34 : f32 to vector<8x128xf32>
    %59 = arith.maximumf %57, %58 : vector<8x128xf32>
    %60 = arith.truncf %59 : vector<8x128xf32> to vector<8x128xbf16>
    %c5 = arith.constant 5 : index
    %c0_35 = arith.constant 0 : index
    %c0_36 = arith.constant 0 : index
    %61 = vector.load %arg3[%c5, %c0_35, %c0_36] : memref<6x128x128xbf16, #tpu.memory_space<vmem>>, vector<1x128x128xbf16>
    %62 = vector.shape_cast %61 : vector<1x128x128xbf16> to vector<128x128xbf16>
    %cst_37 = arith.constant dense<0.000000e+00> : vector<8x128xf32>
    %63 = tpu.matmul %60, %62, %cst_37 {dimension_numbers = #tpu.dot_dimension_numbers<[1], [0], [0], [1], [0, 0, 1, 1], [], []>} : vector<8x128xbf16>, vector<128x128xbf16>, vector<8x128xf32> -> vector<8x128xf32>
    %c4_38 = arith.constant 4 : index
    %c0_39 = arith.constant 0 : index
    %64 = vector.load %arg4[%c4_38, %c0_39] : memref<5x128xf32, #tpu.memory_space<vmem>>, vector<1x128xf32>
    %65 = vector.broadcast %64 : vector<1x128xf32> to vector<8x128xf32>
    %66 = arith.addf %63, %65 : vector<8x128xf32>
    %cst_40 = arith.constant dense<0xFF800000> : vector<8xf32>
    %67 = vector.multi_reduction <maximumf>, %66, %cst_40 [1] : vector<8x128xf32> to vector<8xf32>
    %68 = vector.shape_cast %67 : vector<8xf32> to vector<8x1xf32>
    %69 = vector.broadcast %68 : vector<8x1xf32> to vector<8x128xf32>
    %70 = arith.subf %66, %69 : vector<8x128xf32>
    %71 = math.exp %70 : vector<8x128xf32>
    %cst_41 = arith.constant dense<0.000000e+00> : vector<8xf32>
    %72 = vector.multi_reduction <add>, %71, %cst_41 [1] : vector<8x128xf32> to vector<8xf32>
    %73 = vector.shape_cast %72 : vector<8xf32> to vector<8x1xf32>
    %74 = math.log %73 : vector<8x1xf32>
    %75 = arith.addf %74, %68 : vector<8x1xf32>
    %76 = vector.broadcast %75 : vector<8x1xf32> to vector<8x128xf32>
    %77 = arith.subf %66, %76 : vector<8x128xf32>
    %c0_42 = arith.constant 0 : index
    %c0_43 = arith.constant 0 : index
    %78 = vector.load %arg5[%c0_42, %c0_43] : memref<8x128xf32, #tpu.memory_space<vmem>>, vector<8x128xf32>
    tpu.vector_store %arg5[%c0_42, %c0_43], %77 {strides = array<i32>} : memref<8x128xf32, #tpu.memory_space<vmem>>, vector<8x128xf32>,
    return
  }
  func.func @transform_0(%arg0: i32) -> (i32, i32) {
    %c0_i32 = arith.constant 0 : i32
    %c0_i32_0 = arith.constant 0 : i32
    return %arg0, %c0_i32 : i32, i32
  }
  func.func @transform_1(%arg0: i32) -> (i32, i32) {
    %c0_i32 = arith.constant 0 : i32
    %c0_i32_0 = arith.constant 0 : i32
    %c0_i32_1 = arith.constant 0 : i32
    return %c0_i32, %c0_i32_0 : i32, i32
  }
  func.func @transform_2(%arg0: i32) -> (i32, i32, i32) {
    %c0_i32 = arith.constant 0 : i32
    %c0_i32_0 = arith.constant 0 : i32
    %c0_i32_1 = arith.constant 0 : i32
    %c0_i32_2 = arith.constant 0 : i32
    return %c0_i32, %c0_i32_0, %c0_i32_1 : i32, i32, i32
  }
  func.func @transform_3(%arg0: i32) -> (i32, i32) {
    %c0_i32 = arith.constant 0 : i32
    %c0_i32_0 = arith.constant 0 : i32
    %c0_i32_1 = arith.constant 0 : i32
    return %c0_i32, %c0_i32_0 : i32, i32
  }
  func.func @transform_4(%arg0: i32) -> (i32, i32) {
    %c0_i32 = arith.constant 0 : i32
    %c0_i32_0 = arith.constant 0 : i32
    return %arg0, %c0_i32 : i32, i32
  }
}

</mosaic_0001>

<llo_original>
// kernel: tpu_custom_call.1
$region0: #{tpu_custom_call.1}
  #allocation0 [shape = 'u32[]', space=smem, size = 0x4, offset = 0x4, fixed_abs, tag = 'smem constant byte address 0x4 - core index']
  #allocation1 [shape = 'u32[144,128]{1,0:T(1,128)}', space=vmem, size = 0x12000, scoped, tag = 'internal scratch']
  %s0 = inlined_call_operand.vmem [shape: s32[128,2], index: 0, kind: input, shape index: {}]
  %s1 = inlined_call_operand.vmem [shape: bf16[128,128], index: 1, kind: input, shape index: {}]
  %s2 = inlined_call_operand.hbm [shape: bf16[6,128,128], index: 2, kind: input, shape index: {}]
  %s3 = inlined_call_operand.vmem [shape: f32[5,128], index: 3, kind: input, shape index: {}]
  %s4 = inlined_call_operand.hbm [shape: f32[8,128], index: 4, kind: output, shape index: {}]
  %s5 = sld [smem:[#allocation0]]
  $region30: #{tpu_custom_call.1} parent=0
    _
  %s7 = ssub.s32 1, %s5
  %s8 = scalar_select 0, %s7, %s5
  $region1: #{tpu_custom_call.1} parent=0
    #allocation2 [shape = 'u8[196608]{0}', space=vmem, size = 0x30000, scoped, tag = 'input window, operand 2, single buffered']
    #allocation3 [shape = 's32[1]{0}', space=sflag, size = 0x4, scoped, tag = 'scoped memory for tpu_custom_call.1']
    #allocation4 [shape = 's32[1]{0}', space=sflag, size = 0x4, scoped, tag = 'scoped memory for tpu_custom_call.1']
    #allocation5 [shape = 'u8[4096]{0}', space=vmem, size = 0x1000, scoped, tag = 'output window, operand 0, single buffered']
    %9 = vsyncpa [#allocation3], 0
    %10 = vsyncpa [#allocation4], 0
    // Predicated region
    $region2: #{tpu_custom_call.1} parent=1 // pred_check
      _
    $region3: #{tpu_custom_call.1} parent=1 // pred_check_branch
      %12 = sbr.rel (0) target = $region5
    $region4: #{tpu_custom_call.1} parent=1 // pred_region
      _
    $region5: #{tpu_custom_call.1} parent=1 // pred_fallthru
      _
    // Predicated region
    $region6: #{tpu_custom_call.1} parent=1 // pred_check
      _
    $region7: #{tpu_custom_call.1} parent=1 // pred_check_branch
      %14 = sbr.rel (0) target = $region9
    $region8: #{tpu_custom_call.1} parent=1 // pred_region
      _
    $region9: #{tpu_custom_call.1} parent=1 // pred_fallthru
      _
    // Predicated region
    $region10: #{tpu_custom_call.1} parent=1 // pred_check
      _
    $region11: #{tpu_custom_call.1} parent=1 // pred_check_branch
      %16 = sbr.rel (0) target = $region13
    $region12: #{tpu_custom_call.1} parent=1 // pred_region
      %s18 = ssub.s32 6144, 6144
      %19 = vsyncadd [#allocation3], %s18
      %s20 = sshll.u32 [#allocation2], 4
      %s21 = int_to_ptr.vmem [resolvable:$true] %s20
      %26 = dma.hbm_to_vmem [thread:$0]  %s2, 6144, %s21, [#allocation3], 64, 64, 4
    $region13: #{tpu_custom_call.1} parent=1 // pred_fallthru
      _
    // Predicated region
    $region14: #{tpu_custom_call.1} parent=1 // pred_check
      _
    $region15: #{tpu_custom_call.1} parent=1 // pred_check_branch
      %28 = sbr.rel (0) target = $region17
    $region16: #{tpu_custom_call.1} parent=1 // pred_region
      _
    $region17: #{tpu_custom_call.1} parent=1 // pred_fallthru
      _
    // Predicated region
    $region18: #{tpu_custom_call.1} parent=1 // pred_check
      _
    $region19: #{tpu_custom_call.1} parent=1 // pred_check_branch
      %30 = sbr.rel (0) target = $region21
    $region20: #{tpu_custom_call.1} parent=1 // pred_region
      %31 = dma.done [#allocation3], 6144
    $region21: #{tpu_custom_call.1} parent=1 // pred_fallthru
      _
    %v33 = vld [vmem:[%s0] sm:$0xff]
    %v34 = vld [vmem:[%s0 + $0x8] sm:$0xff]
    %v35 = vld [vmem:[%s0 + $0x10] sm:$0xff]
    %v36 = vld [vmem:[%s0 + $0x18] sm:$0xff]
    %v37 = vld [vmem:[%s0 + $0x20] sm:$0xff]
    %v38 = vld [vmem:[%s0 + $0x28] sm:$0xff]
    %v39 = vld [vmem:[%s0 + $0x30] sm:$0xff]
    %v40 = vld [vmem:[%s0 + $0x38] sm:$0xff]
    %v41 = vld [vmem:[%s0 + $0x40] sm:$0xff]
    %v42 = vld [vmem:[%s0 + $0x48] sm:$0xff]
    %v43 = vld [vmem:[%s0 + $0x50] sm:$0xff]
    %v44 = vld [vmem:[%s0 + $0x58] sm:$0xff]
    %v45 = vld [vmem:[%s0 + $0x60] sm:$0xff]
    %v46 = vld [vmem:[%s0 + $0x68] sm:$0xff]
    %v47 = vld [vmem:[%s0 + $0x70] sm:$0xff]
    %v48 = vld [vmem:[%s0 + $0x78] sm:$0xff]
    %v49 = vcvt.s32.f32 %v33
    %v50 = vcvt.s32.f32 %v34
    %v51 = vcvt.s32.f32 %v35
    %v52 = vcvt.s32.f32 %v36
    %v53 = vcvt.s32.f32 %v37
    %v54 = vcvt.s32.f32 %v38
    %v55 = vcvt.s32.f32 %v39
    %v56 = vcvt.s32.f32 %v40
    %v57 = vcvt.s32.f32 %v41
    %v58 = vcvt.s32.f32 %v42
    %v59 = vcvt.s32.f32 %v43
    %v60 = vcvt.s32.f32 %v44
    %v61 = vcvt.s32.f32 %v45
    %v62 = vcvt.s32.f32 %v46
    %v63 = vcvt.s32.f32 %v47
    %v64 = vcvt.s32.f32 %v48
    %v65 = vlaneseq
    %v66 = vand.u32 %v65, 127
    %67 = vset.pattern.permute.xlu0 0
    %68 = vperm.xlu0 %67, %v33
    %v69 = vpop.permute.xlu0 %68
    %70 = vset.pattern.permute.xlu0 0
    %71 = vperm.xlu0 %70, %v34
    %v72 = vpop.permute.xlu0 %71
    %73 = vset.pattern.permute.xlu0 0
    %74 = vperm.xlu0 %73, %v35
    %v75 = vpop.permute.xlu0 %74
    %76 = vset.pattern.permute.xlu0 0
    %77 = vperm.xlu0 %76, %v36
    %v78 = vpop.permute.xlu0 %77
    %79 = vset.pattern.permute.xlu0 0
    %80 = vperm.xlu0 %79, %v37
    %v81 = vpop.permute.xlu0 %80
    %82 = vset.pattern.permute.xlu0 0
    %83 = vperm.xlu0 %82, %v38
    %v84 = vpop.permute.xlu0 %83
    %85 = vset.pattern.permute.xlu0 0
    %86 = vperm.xlu0 %85, %v39
    %v87 = vpop.permute.xlu0 %86
    %88 = vset.pattern.permute.xlu0 0
    %89 = vperm.xlu0 %88, %v40
    %v90 = vpop.permute.xlu0 %89
    %91 = vset.pattern.permute.xlu0 0
    %92 = vperm.xlu0 %91, %v41
    %v93 = vpop.permute.xlu0 %92
    %94 = vset.pattern.permute.xlu0 0
    %95 = vperm.xlu0 %94, %v42
    %v96 = vpop.permute.xlu0 %95
    %97 = vset.pattern.permute.xlu0 0
    %98 = vperm.xlu0 %97, %v43
    %v99 = vpop.permute.xlu0 %98
    %100 = vset.pattern.permute.xlu0 0
    %101 = vperm.xlu0 %100, %v44
    %v102 = vpop.permute.xlu0 %101
    %103 = vset.pattern.permute.xlu0 0
    %104 = vperm.xlu0 %103, %v45
    %v105 = vpop.permute.xlu0 %104
    %106 = vset.pattern.permute.xlu0 0
    %107 = vperm.xlu0 %106, %v46
    %v108 = vpop.permute.xlu0 %107
    %109 = vset.pattern.permute.xlu0 0
    %110 = vperm.xlu0 %109, %v47
    %v111 = vpop.permute.xlu0 %110
    %112 = vset.pattern.permute.xlu0 0
    %113 = vperm.xlu0 %112, %v48
    %v114 = vpop.permute.xlu0 %113
    %vm115 = vcmp.eq.s32.totalorder %v66, %v69
    %vm116 = vcmp.eq.s32.totalorder %v66, %v72
    %vm117 = vcmp.eq.s32.totalorder %v66, %v75
    %vm118 = vcmp.eq.s32.totalorder %v66, %v78
    %vm119 = vcmp.eq.s32.totalorder %v66, %v81
    %vm120 = vcmp.eq.s32.totalorder %v66, %v84
    %vm121 = vcmp.eq.s32.totalorder %v66, %v87
    %vm122 = vcmp.eq.s32.totalorder %v66, %v90
    %vm123 = vcmp.eq.s32.totalorder %v66, %v93
    %vm124 = vcmp.eq.s32.totalorder %v66, %v96
    %vm125 = vcmp.eq.s32.totalorder %v66, %v99
    %vm126 = vcmp.eq.s32.totalorder %v66, %v102
    %vm127 = vcmp.eq.s32.totalorder %v66, %v105
    %vm128 = vcmp.eq.s32.totalorder %v66, %v108
    %vm129 = vcmp.eq.s32.totalorder %v66, %v111
    %vm130 = vcmp.eq.s32.totalorder %v66, %v114
    %v131 = vsel %vm115, 1, 0
    %v132 = vsel %vm116, 1, 0
    %v133 = vsel %vm117, 1, 0
    %v134 = vsel %vm118, 1, 0
    %v135 = vsel %vm119, 1, 0
    %v136 = vsel %vm120, 1, 0
    %v137 = vsel %vm121, 1, 0
    %v138 = vsel %vm122, 1, 0
    %v139 = vsel %vm123, 1, 0
    %v140 = vsel %vm124, 1, 0
    %v141 = vsel %vm125, 1, 0
    %v142 = vsel %vm126, 1, 0
    %v143 = vsel %vm127, 1, 0
    %v144 = vsel %vm128, 1, 0
    %v145 = vsel %vm129, 1, 0
    %v146 = vsel %vm130, 1, 0
    %v147 = vcvt.s32.f32 %v131
    %v148 = vcvt.s32.f32 %v132
    %v149 = vcvt.s32.f32 %v133
    %v150 = vcvt.s32.f32 %v134
    %v151 = vcvt.s32.f32 %v135
    %v152 = vcvt.s32.f32 %v136
    %v153 = vcvt.s32.f32 %v137
    %v154 = vcvt.s32.f32 %v138
    %v155 = vcvt.s32.f32 %v139
    %v156 = vcvt.s32.f32 %v140
    %v157 = vcvt.s32.f32 %v141
    %v158 = vcvt.s32.f32 %v142
    %v159 = vcvt.s32.f32 %v143
    %v160 = vcvt.s32.f32 %v144
    %v161 = vcvt.s32.f32 %v145
    %v162 = vcvt.s32.f32 %v146
    %v163 = vpack.c.bf16 %v148, %v147
    %v164 = vpack.c.bf16 %v150, %v149
    %v165 = vpack.c.bf16 %v152, %v151
    %v166 = vpack.c.bf16 %v154, %v153
    %v167 = vpack.c.bf16 %v156, %v155
    %v168 = vpack.c.bf16 %v158, %v157
    %v169 = vpack.c.bf16 %v160, %v159
    %v170 = vpack.c.bf16 %v162, %v161
    %v171 = vld [vmem:[%s1] sm:$0xf]
    %v172 = vld [vmem:[%s1 + $0x4] sm:$0xf]
    %v173 = vld [vmem:[%s1 + $0x8] sm:$0xf]
    %v174 = vld [vmem:[%s1 + $0xc] sm:$0xf]
    %v175 = vld [vmem:[%s1 + $0x10] sm:$0xf]
    %v176 = vld [vmem:[%s1 + $0x14] sm:$0xf]
    %v177 = vld [vmem:[%s1 + $0x18] sm:$0xf]
    %v178 = vld [vmem:[%s1 + $0x1c] sm:$0xf]
    %v179 = vld [vmem:[%s1 + $0x20] sm:$0xf]
    %v180 = vld [vmem:[%s1 + $0x24] sm:$0xf]
    %v181 = vld [vmem:[%s1 + $0x28] sm:$0xf]
    %v182 = vld [vmem:[%s1 + $0x2c] sm:$0xf]
    %v183 = vld [vmem:[%s1 + $0x30] sm:$0xf]
    %v184 = vld [vmem:[%s1 + $0x34] sm:$0xf]
    %v185 = vld [vmem:[%s1 + $0x38] sm:$0xf]
    %v186 = vld [vmem:[%s1 + $0x3c] sm:$0xf]
    %v203 = vunpack.c.l.b16 %v171
    %v204 = vunpack.c.l.b16 %v172
    %v205 = vunpack.c.l.b16 %v173
    %v206 = vunpack.c.l.b16 %v174
    %v207 = vunpack.c.l.b16 %v175
    %v208 = vunpack.c.l.b16 %v176
    %v209 = vunpack.c.l.b16 %v177
    %v210 = vunpack.c.l.b16 %v178
    %v211 = vunpack.c.l.b16 %v179
    %v212 = vunpack.c.l.b16 %v180
    %v213 = vunpack.c.l.b16 %v181
    %v214 = vunpack.c.l.b16 %v182
    %v215 = vunpack.c.l.b16 %v183
    %v216 = vunpack.c.l.b16 %v184
    %v217 = vunpack.c.l.b16 %v185
    %v218 = vunpack.c.l.b16 %v186
    %v219 = vpack.c.b16 %v204, %v203
    %v220 = vpack.c.b16 %v206, %v205
    %v221 = vpack.c.b16 %v208, %v207
    %v222 = vpack.c.b16 %v210, %v209
    %v223 = vpack.c.b16 %v212, %v211
    %v224 = vpack.c.b16 %v214, %v213
    %v225 = vpack.c.b16 %v216, %v215
    %v226 = vpack.c.b16 %v218, %v217
    %235 = vmatprep.subr.bf16.mxu0 0
    %236 = vmatpush1.bf16.msra.mxu0 %v219
    %237 = vmatprep.subr.bf16.mxu0 0
    %238 = vmatpush1.bf16.msra.mxu0 %v220
    %239 = vmatprep.subr.bf16.mxu0 0
    %240 = vmatpush1.bf16.msra.mxu0 %v221
    %241 = vmatprep.subr.bf16.mxu0 0
    %242 = vmatpush1.bf16.msra.mxu0 %v222
    %243 = vmatprep.subr.bf16.mxu0 0
    %244 = vmatpush1.bf16.msra.mxu0 %v223
    %245 = vmatprep.subr.bf16.mxu0 0
    %246 = vmatpush1.bf16.msra.mxu0 %v224
    %247 = vmatprep.subr.bf16.mxu0 0
    %248 = vmatpush1.bf16.msra.mxu0 %v225
    %249 = vmatprep.subr.bf16.mxu0 0
    %250 = vmatpush1.bf16.msra.mxu0 %v226
    %251 = vmatprep.subr.bf16.mxu0 0
    %252 = vmatpush1.bf16.msra.mxu0 0
    %253 = vmatprep.subr.bf16.mxu0 0
    %254 = vmatpush1.bf16.msra.mxu0 0
    %255 = vmatprep.subr.bf16.mxu0 0
    %256 = vmatpush1.bf16.msra.mxu0 0
    %257 = vmatprep.subr.bf16.mxu0 0
    %258 = vmatpush1.bf16.msra.mxu0 0
    %259 = vmatprep.subr.bf16.mxu0 0
    %260 = vmatpush1.bf16.msra.mxu0 0
    %261 = vmatprep.subr.bf16.mxu0 0
    %262 = vmatpush1.bf16.msra.mxu0 0
    %263 = vmatprep.subr.bf16.mxu0 0
    %264 = vmatpush1.bf16.msra.mxu0 0
    %265 = vmatprep.subr.bf16.mxu0 0
    %266 = vmatpush1.bf16.msra.mxu0 0
    %267 = vmatprep.mubr.bf16.mxu0 0
    %268 = vmatmul.mubr.bf16.gmra.mrb[0].mxu0 %v163
    %v269 = vpop.f32.mrb[0].mxu0
    %v270 = vadd.f32 0.0, %v269
    %v271 = vpop.f32.mrb[0].mxu0
    %v272 = vpop.f32.mrb[0].mxu0
    %v273 = vadd.f32 0.0, %v272
    %v274 = vpop.f32.mrb[0].mxu0
    %275 = vmatprep.mubr.bf16.mxu0 0
    %276 = vmatmul.mubr.bf16.gmra.mrb[0].mxu0 %v164
    %v277 = vpop.f32.mrb[0].mxu0
    %v278 = vadd.f32 0.0, %v277
    %v279 = vpop.f32.mrb[0].mxu0
    %v280 = vpop.f32.mrb[0].mxu0
    %v281 = vadd.f32 0.0, %v280
    %v282 = vpop.f32.mrb[0].mxu0
    %283 = vmatprep.mubr.bf16.mxu0 0
    %284 = vmatmul.mubr.bf16.gmra.mrb[0].mxu0 %v165
    %v285 = vpop.f32.mrb[0].mxu0
    %v286 = vadd.f32 0.0, %v285
    %v287 = vpop.f32.mrb[0].mxu0
    %v288 = vpop.f32.mrb[0].mxu0
    %v289 = vadd.f32 0.0, %v288
    %v290 = vpop.f32.mrb[0].mxu0
    %291 = vmatprep.mubr.bf16.mxu0 0
    %292 = vmatmul.mubr.bf16.gmra.mrb[0].mxu0 %v166
    %v293 = vpop.f32.mrb[0].mxu0
    %v294 = vadd.f32 0.0, %v293
    %v295 = vpop.f32.mrb[0].mxu0
    %v296 = vpop.f32.mrb[0].mxu0
    %v297 = vadd.f32 0.0, %v296
    %v298 = vpop.f32.mrb[0].mxu0
    %299 = vmatprep.mubr.bf16.mxu0 0
    %300 = vmatmul.mubr.bf16.gmra.mrb[0].mxu0 %v167
    %v301 = vpop.f32.mrb[0].mxu0
    %v302 = vadd.f32 0.0, %v301
    %v303 = vpop.f32.mrb[0].mxu0
    %v304 = vpop.f32.mrb[0].mxu0
    %v305 = vadd.f32 0.0, %v304
    %v306 = vpop.f32.mrb[0].mxu0
    %307 = vmatprep.mubr.bf16.mxu0 0
    %308 = vmatmul.mubr.bf16.gmra.mrb[0].mxu0 %v168
    %v309 = vpop.f32.mrb[0].mxu0
    %v310 = vadd.f32 0.0, %v309
    %v311 = vpop.f32.mrb[0].mxu0
    %v312 = vpop.f32.mrb[0].mxu0
    %v313 = vadd.f32 0.0, %v312
    %v314 = vpop.f32.mrb[0].mxu0
    %315 = vmatprep.mubr.bf16.mxu0 0
    %316 = vmatmul.mubr.bf16.gmra.mrb[0].mxu0 %v169
    %v317 = vpop.f32.mrb[0].mxu0
    %v318 = vadd.f32 0.0, %v317
    %v319 = vpop.f32.mrb[0].mxu0
    %v320 = vpop.f32.mrb[0].mxu0
    %v321 = vadd.f32 0.0, %v320
    %v322 = vpop.f32.mrb[0].mxu0
    %323 = vmatprep.mubr.bf16.mxu0 0
    %324 = vmatmul.mubr.bf16.gmra.mrb[0].mxu0 %v170
    %v325 = vpop.f32.mrb[0].mxu0
    %v326 = vadd.f32 0.0, %v325
    %v327 = vpop.f32.mrb[0].mxu0
    %v328 = vpop.f32.mrb[0].mxu0
    %v329 = vadd.f32 0.0, %v328
    %v330 = vpop.f32.mrb[0].mxu0
    %331 = vdwg.mxu0
    %v332 = vpack.c.bf16 %v273, %v270
    %v333 = vpack.c.bf16 %v281, %v278
    %v334 = vpack.c.bf16 %v289, %v286
    %v335 = vpack.c.bf16 %v297, %v294
    %v336 = vpack.c.bf16 %v305, %v302
    %v337 = vpack.c.bf16 %v313, %v310
    %v338 = vpack.c.bf16 %v321, %v318
    %v339 = vpack.c.bf16 %v329, %v326
    %v340 = vld [vmem:[#allocation2] sm:$0xf]
    %v341 = vld [vmem:[#allocation2 + $0x4] sm:$0xf]
    %v342 = vld [vmem:[#allocation2 + $0x8] sm:$0xf]
    %v343 = vld [vmem:[#allocation2 + $0xc] sm:$0xf]
    %v344 = vld [vmem:[#allocation2 + $0x10] sm:$0xf]
    %v345 = vld [vmem:[#allocation2 + $0x14] sm:$0xf]
    %v346 = vld [vmem:[#allocation2 + $0x18] sm:$0xf]
    %v347 = vld [vmem:[#allocation2 + $0x1c] sm:$0xf]
    %v348 = vld [vmem:[#allocation2 + $0x20] sm:$0xf]
    %v349 = vld [vmem:[#allocation2 + $0x24] sm:$0xf]
    %v350 = vld [vmem:[#allocation2 + $0x28] sm:$0xf]
    %v351 = vld [vmem:[#allocation2 + $0x2c] sm:$0xf]
    %v352 = vld [vmem:[#allocation2 + $0x30] sm:$0xf]
    %v353 = vld [vmem:[#allocation2 + $0x34] sm:$0xf]
    %v354 = vld [vmem:[#allocation2 + $0x38] sm:$0xf]
    %v355 = vld [vmem:[#allocation2 + $0x3c] sm:$0xf]
    %v356 = vld [vmem:[%s3] sm:$0x1]
    %v357 = vlaneseq
    %v358 = vshrl.u32 %v357, 7
    %v359 = vsub.s32 0, %v358
    %v360 = vrot.slane %v356, %v359
    %v377 = vunpack.c.l.b16 %v340
    %v378 = vunpack.c.l.b16 %v341
    %v379 = vunpack.c.l.b16 %v342
    %v380 = vunpack.c.l.b16 %v343
    %v381 = vunpack.c.l.b16 %v344
    %v382 = vunpack.c.l.b16 %v345
    %v383 = vunpack.c.l.b16 %v346
    %v384 = vunpack.c.l.b16 %v347
    %v385 = vunpack.c.l.b16 %v348
    %v386 = vunpack.c.l.b16 %v349
    %v387 = vunpack.c.l.b16 %v350
    %v388 = vunpack.c.l.b16 %v351
    %v389 = vunpack.c.l.b16 %v352
    %v390 = vunpack.c.l.b16 %v353
    %v391 = vunpack.c.l.b16 %v354
    %v392 = vunpack.c.l.b16 %v355
    %v393 = vpack.c.b16 %v378, %v377
    %v394 = vpack.c.b16 %v380, %v379
    %v395 = vpack.c.b16 %v382, %v381
    %v396 = vpack.c.b16 %v384, %v383
    %v397 = vpack.c.b16 %v386, %v385
    %v398 = vpack.c.b16 %v388, %v387
    %v399 = vpack.c.b16 %v390, %v389
    %v400 = vpack.c.b16 %v392, %v391
    %409 = vmatprep.subr.bf16.mxu0 0
    %410 = vmatpush1.bf16.msra.mxu0 %v393
    %411 = vmatprep.subr.bf16.mxu0 0
    %412 = vmatpush1.bf16.msra.mxu0 %v394
    %413 = vmatprep.subr.bf16.mxu0 0
    %414 = vmatpush1.bf16.msra.mxu0 %v395
    %415 = vmatprep.subr.bf16.mxu0 0
    %416 = vmatpush1.bf16.msra.mxu0 %v396
    %417 = vmatprep.subr.bf16.mxu0 0
    %418 = vmatpush1.bf16.msra.mxu0 %v397
    %419 = vmatprep.subr.bf16.mxu0 0
    %420 = vmatpush1.bf16.msra.mxu0 %v398
    %421 = vmatprep.subr.bf16.mxu0 0
    %422 = vmatpush1.bf16.msra.mxu0 %v399
    %423 = vmatprep.subr.bf16.mxu0 0
    %424 = vmatpush1.bf16.msra.mxu0 %v400
    %425 = vmatprep.subr.bf16.mxu0 0
    %426 = vmatpush1.bf16.msra.mxu0 0
    %427 = vmatprep.subr.bf16.mxu0 0
    %428 = vmatpush1.bf16.msra.mxu0 0
    %429 = vmatprep.subr.bf16.mxu0 0
    %430 = vmatpush1.bf16.msra.mxu0 0
    %431 = vmatprep.subr.bf16.mxu0 0
    %432 = vmatpush1.bf16.msra.mxu0 0
    %433 = vmatprep.subr.bf16.mxu0 0
    %434 = vmatpush1.bf16.msra.mxu0 0
    %435 = vmatprep.subr.bf16.mxu0 0
    %436 = vmatpush1.bf16.msra.mxu0 0
    %437 = vmatprep.subr.bf16.mxu0 0
    %438 = vmatpush1.bf16.msra.mxu0 0
    %439 = vmatprep.subr.bf16.mxu0 0
    %440 = vmatpush1.bf16.msra.mxu0 0
    %441 = vmatprep.mubr.bf16.mxu0 0
    %442 = vmatmul.mubr.bf16.gmra.mrb[0].mxu0 %v332
    %v443 = vpop.f32.mrb[0].mxu0
    %v444 = vadd.f32 %v360, %v443
    %v445 = vpop.f32.mrb[0].mxu0
    %v446 = vpop.f32.mrb[0].mxu0
    %v447 = vadd.f32 %v360, %v446
    %v448 = vpop.f32.mrb[0].mxu0
    %449 = vmatprep.mubr.bf16.mxu0 0
    %450 = vmatmul.mubr.bf16.gmra.mrb[0].mxu0 %v333
    %v451 = vpop.f32.mrb[0].mxu0
    %v452 = vadd.f32 %v360, %v451
    %v453 = vpop.f32.mrb[0].mxu0
    %v454 = vpop.f32.mrb[0].mxu0
    %v455 = vadd.f32 %v360, %v454
    %v456 = vpop.f32.mrb[0].mxu0
    %457 = vmatprep.mubr.bf16.mxu0 0
    %458 = vmatmul.mubr.bf16.gmra.mrb[0].mxu0 %v334
    %v459 = vpop.f32.mrb[0].mxu0
    %v460 = vadd.f32 %v360, %v459
    %v461 = vpop.f32.mrb[0].mxu0
    %v462 = vpop.f32.mrb[0].mxu0
    %v463 = vadd.f32 %v360, %v462
    %v464 = vpop.f32.mrb[0].mxu0
    %465 = vmatprep.mubr.bf16.mxu0 0
    %466 = vmatmul.mubr.bf16.gmra.mrb[0].mxu0 %v335
    %v467 = vpop.f32.mrb[0].mxu0
    %v468 = vadd.f32 %v360, %v467
    %v469 = vpop.f32.mrb[0].mxu0
    %v470 = vpop.f32.mrb[0].mxu0
    %v471 = vadd.f32 %v360, %v470
    %v472 = vpop.f32.mrb[0].mxu0
    %473 = vmatprep.mubr.bf16.mxu0 0
    %474 = vmatmul.mubr.bf16.gmra.mrb[0].mxu0 %v336
    %v475 = vpop.f32.mrb[0].mxu0
    %v476 = vadd.f32 %v360, %v475
    %v477 = vpop.f32.mrb[0].mxu0
    %v478 = vpop.f32.mrb[0].mxu0
    %v479 = vadd.f32 %v360, %v478
    %v480 = vpop.f32.mrb[0].mxu0
    %481 = vmatprep.mubr.bf16.mxu0 0
    %482 = vmatmul.mubr.bf16.gmra.mrb[0].mxu0 %v337
    %v483 = vpop.f32.mrb[0].mxu0
    %v484 = vadd.f32 %v360, %v483
    %v485 = vpop.f32.mrb[0].mxu0
    %v486 = vpop.f32.mrb[0].mxu0
    %v487 = vadd.f32 %v360, %v486
    %v488 = vpop.f32.mrb[0].mxu0
    %489 = vmatprep.mubr.bf16.mxu0 0
    %490 = vmatmul.mubr.bf16.gmra.mrb[0].mxu0 %v338
    %v491 = vpop.f32.mrb[0].mxu0
    %v492 = vadd.f32 %v360, %v491
    %v493 = vpop.f32.mrb[0].mxu0
    %v494 = vpop.f32.mrb[0].mxu0
    %v495 = vadd.f32 %v360, %v494
    %v496 = vpop.f32.mrb[0].mxu0
    %497 = vmatprep.mubr.bf16.mxu0 0
    %498 = vmatmul.mubr.bf16.gmra.mrb[0].mxu0 %v339
    %v499 = vpop.f32.mrb[0].mxu0
    %v500 = vadd.f32 %v360, %v499
    %v501 = vpop.f32.mrb[0].mxu0
    %v502 = vpop.f32.mrb[0].mxu0
    %v503 = vadd.f32 %v360, %v502
    %v504 = vpop.f32.mrb[0].mxu0
    %505 = vdwg.mxu0
    %v506 = vmax.f32 %v444, 0.0
    %v507 = vmax.f32 %v447, 0.0
    %v508 = vmax.f32 %v452, 0.0
    %v509 = vmax.f32 %v455, 0.0
    %v510 = vmax.f32 %v460, 0.0
    %v511 = vmax.f32 %v463, 0.0
    %v512 = vmax.f32 %v468, 0.0
    %v513 = vmax.f32 %v471, 0.0
    %v514 = vmax.f32 %v476, 0.0
    %v515 = vmax.f32 %v479, 0.0
    %v516 = vmax.f32 %v484, 0.0
    %v517 = vmax.f32 %v487, 0.0
    %v518 = vmax.f32 %v492, 0.0
    %v519 = vmax.f32 %v495, 0.0
    %v520 = vmax.f32 %v500, 0.0
    %v521 = vmax.f32 %v503, 0.0
    %523 = vset.pattern.permute.xlu0 1
    %524 = vperm.xlu0 %523, %v49
    %v525 = vpop.permute.xlu0 %524
    %528 = vset.pattern.permute.xlu0 1
    %529 = vperm.xlu0 %528, %v50
    %v530 = vpop.permute.xlu0 %529
    %533 = vset.pattern.permute.xlu0 1
    %534 = vperm.xlu0 %533, %v51
    %v535 = vpop.permute.xlu0 %534
    %538 = vset.pattern.permute.xlu0 1
    %539 = vperm.xlu0 %538, %v52
    %v540 = vpop.permute.xlu0 %539
    %543 = vset.pattern.permute.xlu0 1
    %544 = vperm.xlu0 %543, %v53
    %v545 = vpop.permute.xlu0 %544
    %548 = vset.pattern.permute.xlu0 1
    %549 = vperm.xlu0 %548, %v54
    %v550 = vpop.permute.xlu0 %549
    %553 = vset.pattern.permute.xlu0 1
    %554 = vperm.xlu0 %553, %v55
    %v555 = vpop.permute.xlu0 %554
    %558 = vset.pattern.permute.xlu0 1
    %559 = vperm.xlu0 %558, %v56
    %v560 = vpop.permute.xlu0 %559
    %563 = vset.pattern.permute.xlu0 1
    %564 = vperm.xlu0 %563, %v57
    %v565 = vpop.permute.xlu0 %564
    %568 = vset.pattern.permute.xlu0 1
    %569 = vperm.xlu0 %568, %v58
    %v570 = vpop.permute.xlu0 %569
    %573 = vset.pattern.permute.xlu0 1
    %574 = vperm.xlu0 %573, %v59
    %v575 = vpop.permute.xlu0 %574
    %578 = vset.pattern.permute.xlu0 1
    %579 = vperm.xlu0 %578, %v60
    %v580 = vpop.permute.xlu0 %579
    %583 = vset.pattern.permute.xlu0 1
    %584 = vperm.xlu0 %583, %v61
    %v585 = vpop.permute.xlu0 %584
    %588 = vset.pattern.permute.xlu0 1
    %589 = vperm.xlu0 %588, %v62
    %v590 = vpop.permute.xlu0 %589
    %593 = vset.pattern.permute.xlu0 1
    %594 = vperm.xlu0 %593, %v63
    %v595 = vpop.permute.xlu0 %594
    %598 = vset.pattern.permute.xlu0 1
    %599 = vperm.xlu0 %598, %v64
    %v600 = vpop.permute.xlu0 %599
    %v602 = vmul.f32 %v506, %v525
    %v603 = vmul.f32 %v507, %v530
    %v604 = vmul.f32 %v508, %v535
    %v605 = vmul.f32 %v509, %v540
    %v606 = vmul.f32 %v510, %v545
    %v607 = vmul.f32 %v511, %v550
    %v608 = vmul.f32 %v512, %v555
    %v609 = vmul.f32 %v513, %v560
    %v610 = vmul.f32 %v514, %v565
    %v611 = vmul.f32 %v515, %v570
    %v612 = vmul.f32 %v516, %v575
    %v613 = vmul.f32 %v517, %v580
    %v614 = vmul.f32 %v518, %v585
    %v615 = vmul.f32 %v519, %v590
    %v616 = vmul.f32 %v520, %v595
    %v617 = vmul.f32 %v521, %v600
    %v618 = vrot.slane %v602, 4
    %v619 = vadd.f32 %v602, %v618
    %v620 = vrot.slane %v619, 2
    %v621 = vadd.f32 %v619, %v620
    %v622 = vrot.slane %v621, 1
    %v623 = vadd.f32 %v621, %v622
    %v624 = vrot.slane %v603, 4
    %v625 = vadd.f32 %v603, %v624
    %v626 = vrot.slane %v625, 2
    %v627 = vadd.f32 %v625, %v626
    %v628 = vrot.slane %v627, 1
    %v629 = vadd.f32 %v627, %v628
    %v630 = vrot.slane %v604, 4
    %v631 = vadd.f32 %v604, %v630
    %v632 = vrot.slane %v631, 2
    %v633 = vadd.f32 %v631, %v632
    %v634 = vrot.slane %v633, 1
    %v635 = vadd.f32 %v633, %v634
    %v636 = vrot.slane %v605, 4
    %v637 = vadd.f32 %v605, %v636
    %v638 = vrot.slane %v637, 2
    %v639 = vadd.f32 %v637, %v638
    %v640 = vrot.slane %v639, 1
    %v641 = vadd.f32 %v639, %v640
    %v642 = vrot.slane %v606, 4
    %v643 = vadd.f32 %v606, %v642
    %v644 = vrot.slane %v643, 2
    %v645 = vadd.f32 %v643, %v644
    %v646 = vrot.slane %v645, 1
    %v647 = vadd.f32 %v645, %v646
    %v648 = vrot.slane %v607, 4
    %v649 = vadd.f32 %v607, %v648
    %v650 = vrot.slane %v649, 2
    %v651 = vadd.f32 %v649, %v650
    %v652 = vrot.slane %v651, 1
    %v653 = vadd.f32 %v651, %v652
    %v654 = vrot.slane %v608, 4
    %v655 = vadd.f32 %v608, %v654
    %v656 = vrot.slane %v655, 2
    %v657 = vadd.f32 %v655, %v656
    %v658 = vrot.slane %v657, 1
    %v659 = vadd.f32 %v657, %v658
    %v660 = vrot.slane %v609, 4
    %v661 = vadd.f32 %v609, %v660
    %v662 = vrot.slane %v661, 2
    %v663 = vadd.f32 %v661, %v662
    %v664 = vrot.slane %v663, 1
    %v665 = vadd.f32 %v663, %v664
    %v666 = vrot.slane %v610, 4
    %v667 = vadd.f32 %v610, %v666
    %v668 = vrot.slane %v667, 2
    %v669 = vadd.f32 %v667, %v668
    %v670 = vrot.slane %v669, 1
    %v671 = vadd.f32 %v669, %v670
    %v672 = vrot.slane %v611, 4
    %v673 = vadd.f32 %v611, %v672
    %v674 = vrot.slane %v673, 2
    %v675 = vadd.f32 %v673, %v674
    %v676 = vrot.slane %v675, 1
    %v677 = vadd.f32 %v675, %v676
    %v678 = vrot.slane %v612, 4
    %v679 = vadd.f32 %v612, %v678
    %v680 = vrot.slane %v679, 2
    %v681 = vadd.f32 %v679, %v680
    %v682 = vrot.slane %v681, 1
    %v683 = vadd.f32 %v681, %v682
    %v684 = vrot.slane %v613, 4
    %v685 = vadd.f32 %v613, %v684
    %v686 = vrot.slane %v685, 2
    %v687 = vadd.f32 %v685, %v686
    %v688 = vrot.slane %v687, 1
    %v689 = vadd.f32 %v687, %v688
    %v690 = vrot.slane %v614, 4
    %v691 = vadd.f32 %v614, %v690
    %v692 = vrot.slane %v691, 2
    %v693 = vadd.f32 %v691, %v692
    %v694 = vrot.slane %v693, 1
    %v695 = vadd.f32 %v693, %v694
    %v696 = vrot.slane %v615, 4
    %v697 = vadd.f32 %v615, %v696
    %v698 = vrot.slane %v697, 2
    %v699 = vadd.f32 %v697, %v698
    %v700 = vrot.slane %v699, 1
    %v701 = vadd.f32 %v699, %v700
    %v702 = vrot.slane %v616, 4
    %v703 = vadd.f32 %v616, %v702
    %v704 = vrot.slane %v703, 2
    %v705 = vadd.f32 %v703, %v704
    %v706 = vrot.slane %v705, 1
    %v707 = vadd.f32 %v705, %v706
    %v708 = vrot.slane %v617, 4
    %v709 = vadd.f32 %v617, %v708
    %v710 = vrot.slane %v709, 2
    %v711 = vadd.f32 %v709, %v710
    %v712 = vrot.slane %v711, 1
    %v713 = vadd.f32 %v711, %v712
    %v714 = vpack.c.bf16 %v623, %v623
    %v715 = vpack.c.bf16 %v629, %v629
    %v716 = vpack.c.bf16 %v635, %v635
    %v717 = vpack.c.bf16 %v641, %v641
    %v718 = vpack.c.bf16 %v647, %v647
    %v719 = vpack.c.bf16 %v653, %v653
    %v720 = vpack.c.bf16 %v659, %v659
    %v721 = vpack.c.bf16 %v665, %v665
    %s722 = scalar_lea.vmem [#allocation2], 64
    %v723 = vld [vmem:[%s722] sm:$0xf]
    %v724 = vld [vmem:[%s722 + $0x4] sm:$0xf]
    %v725 = vld [vmem:[%s722 + $0x8] sm:$0xf]
    %v726 = vld [vmem:[%s722 + $0xc] sm:$0xf]
    %v727 = vld [vmem:[%s722 + $0x10] sm:$0xf]
    %v728 = vld [vmem:[%s722 + $0x14] sm:$0xf]
    %v729 = vld [vmem:[%s722 + $0x18] sm:$0xf]
    %v730 = vld [vmem:[%s722 + $0x1c] sm:$0xf]
    %v731 = vld [vmem:[%s722 + $0x20] sm:$0xf]
    %v732 = vld [vmem:[%s722 + $0x24] sm:$0xf]
    %v733 = vld [vmem:[%s722 + $0x28] sm:$0xf]
    %v734 = vld [vmem:[%s722 + $0x2c] sm:$0xf]
    %v735 = vld [vmem:[%s722 + $0x30] sm:$0xf]
    %v736 = vld [vmem:[%s722 + $0x34] sm:$0xf]
    %v737 = vld [vmem:[%s722 + $0x38] sm:$0xf]
    %v738 = vld [vmem:[%s722 + $0x3c] sm:$0xf]
    %v739 = vpack.c.bf16 %v671, %v671
    %v740 = vpack.c.bf16 %v677, %v677
    %v741 = vpack.c.bf16 %v683, %v683
    %v742 = vpack.c.bf16 %v689, %v689
    %v743 = vpack.c.bf16 %v695, %v695
    %v744 = vpack.c.bf16 %v701, %v701
    %v745 = vpack.c.bf16 %v707, %v707
    %v746 = vpack.c.bf16 %v713, %v713
    %s747 = scalar_lea.vmem [#allocation2], 128
    %v748 = vld [vmem:[%s747] sm:$0xf]
    %v749 = vld [vmem:[%s747 + $0x4] sm:$0xf]
    %v750 = vld [vmem:[%s747 + $0x8] sm:$0xf]
    %v751 = vld [vmem:[%s747 + $0xc] sm:$0xf]
    %v752 = vld [vmem:[%s747 + $0x10] sm:$0xf]
    %v753 = vld [vmem:[%s747 + $0x14] sm:$0xf]
    %v754 = vld [vmem:[%s747 + $0x18] sm:$0xf]
    %v755 = vld [vmem:[%s747 + $0x1c] sm:$0xf]
    %v756 = vld [vmem:[%s747 + $0x20] sm:$0xf]
    %v757 = vld [vmem:[%s747 + $0x24] sm:$0xf]
    %v758 = vld [vmem:[%s747 + $0x28] sm:$0xf]
    %v759 = vld [vmem:[%s747 + $0x2c] sm:$0xf]
    %v760 = vld [vmem:[%s747 + $0x30] sm:$0xf]
    %v761 = vld [vmem:[%s747 + $0x34] sm:$0xf]
    %v762 = vld [vmem:[%s747 + $0x38] sm:$0xf]
    %v763 = vld [vmem:[%s747 + $0x3c] sm:$0xf]
    %v772 = vunpack.c.l.b16 %v739
    %v773 = vunpack.c.l.b16 %v740
    %v774 = vunpack.c.l.b16 %v741
    %v775 = vunpack.c.l.b16 %v742
    %v776 = vunpack.c.l.b16 %v743
    %v777 = vunpack.c.l.b16 %v744
    %v778 = vunpack.c.l.b16 %v745
    %v779 = vunpack.c.l.b16 %v746
    %vm780 = vcmask 1041409
    %v781 = vsel %vm780, %v773, %v772
    %vm782 = vcmask 1042434
    %v783 = vsel %vm782, %v774, %v781
    %vm784 = vcmask 1043459
    %v785 = vsel %vm784, %v775, %v783
    %vm786 = vcmask 1044484
    %v787 = vsel %vm786, %v776, %v785
    %vm788 = vcmask 1045509
    %v789 = vsel %vm788, %v777, %v787
    %vm790 = vcmask 1046534
    %v791 = vsel %vm790, %v778, %v789
    %vm792 = vcmask 1047559
    %v793 = vsel %vm792, %v779, %v791
    %v794 = vpack.c.b16 %v793, %v793
    %v812 = vunpack.c.l.b16 %v748
    %v813 = vunpack.c.l.b16 %v749
    %v814 = vunpack.c.l.b16 %v750
    %v815 = vunpack.c.l.b16 %v751
    %v816 = vunpack.c.l.b16 %v752
    %v817 = vunpack.c.l.b16 %v753
    %v818 = vunpack.c.l.b16 %v754
    %v819 = vunpack.c.l.b16 %v755
    %v820 = vunpack.c.l.b16 %v756
    %v821 = vunpack.c.l.b16 %v757
    %v822 = vunpack.c.l.b16 %v758
    %v823 = vunpack.c.l.b16 %v759
    %v824 = vunpack.c.l.b16 %v760
    %v825 = vunpack.c.l.b16 %v761
    %v826 = vunpack.c.l.b16 %v762
    %v827 = vunpack.c.l.b16 %v763
    %v828 = vpack.c.b16 %v813, %v812
    %v829 = vpack.c.b16 %v815, %v814
    %v830 = vpack.c.b16 %v817, %v816
    %v831 = vpack.c.b16 %v819, %v818
    %v832 = vpack.c.b16 %v821, %v820
    %v833 = vpack.c.b16 %v823, %v822
    %v834 = vpack.c.b16 %v825, %v824
    %v835 = vpack.c.b16 %v827, %v826
    %844 = vmatprep.subr.bf16.mxu0 0
    %845 = vmatpush1.bf16.msra.mxu0 %v828
    %846 = vmatprep.subr.bf16.mxu0 0
    %847 = vmatpush1.bf16.msra.mxu0 %v829
    %848 = vmatprep.subr.bf16.mxu0 0
    %849 = vmatpush1.bf16.msra.mxu0 %v830
    %850 = vmatprep.subr.bf16.mxu0 0
    %851 = vmatpush1.bf16.msra.mxu0 %v831
    %852 = vmatprep.subr.bf16.mxu0 0
    %853 = vmatpush1.bf16.msra.mxu0 %v832
    %854 = vmatprep.subr.bf16.mxu0 0
    %855 = vmatpush1.bf16.msra.mxu0 %v833
    %856 = vmatprep.subr.bf16.mxu0 0
    %857 = vmatpush1.bf16.msra.mxu0 %v834
    %858 = vmatprep.subr.bf16.mxu0 0
    %859 = vmatpush1.bf16.msra.mxu0 %v835
    %860 = vmatprep.subr.bf16.mxu0 0
    %861 = vmatpush1.bf16.msra.mxu0 0
    %862 = vmatprep.subr.bf16.mxu0 0
    %863 = vmatpush1.bf16.msra.mxu0 0
    %864 = vmatprep.subr.bf16.mxu0 0
    %865 = vmatpush1.bf16.msra.mxu0 0
    %866 = vmatprep.subr.bf16.mxu0 0
    %867 = vmatpush1.bf16.msra.mxu0 0
    %868 = vmatprep.subr.bf16.mxu0 0
    %869 = vmatpush1.bf16.msra.mxu0 0
    %870 = vmatprep.subr.bf16.mxu0 0
    %871 = vmatpush1.bf16.msra.mxu0 0
    %872 = vmatprep.subr.bf16.mxu0 0
    %873 = vmatpush1.bf16.msra.mxu0 0
    %874 = vmatprep.subr.bf16.mxu0 0
    %875 = vmatpush1.bf16.msra.mxu0 0
    %876 = vmatprep.mubr.bf16.mxu0 0
    %877 = vmatmul.mubr.bf16.gmra.mrb[0].mxu0 %v794
    %v878 = vpop.f32.mrb[0].mxu0
    %v879 = vadd.f32 0.0, %v878
    %v880 = vpop.f32.mrb[0].mxu0
    %v881 = vpop.f32.mrb[0].mxu0
    %v882 = vpop.f32.mrb[0].mxu0
    %883 = vdwg.mxu0
    %v892 = vunpack.c.l.b16 %v714
    %v893 = vunpack.c.l.b16 %v715
    %v894 = vunpack.c.l.b16 %v716
    %v895 = vunpack.c.l.b16 %v717
    %v896 = vunpack.c.l.b16 %v718
    %v897 = vunpack.c.l.b16 %v719
    %v898 = vunpack.c.l.b16 %v720
    %v899 = vunpack.c.l.b16 %v721
    %v900 = vsel %vm780, %v893, %v892
    %v901 = vsel %vm782, %v894, %v900
    %v902 = vsel %vm784, %v895, %v901
    %v903 = vsel %vm786, %v896, %v902
    %v904 = vsel %vm788, %v897, %v903
    %v905 = vsel %vm790, %v898, %v904
    %v906 = vsel %vm792, %v899, %v905
    %v907 = vpack.c.b16 %v906, %v906
    %v925 = vunpack.c.l.b16 %v723
    %v926 = vunpack.c.l.b16 %v724
    %v927 = vunpack.c.l.b16 %v725
    %v928 = vunpack.c.l.b16 %v726
    %v929 = vunpack.c.l.b16 %v727
    %v930 = vunpack.c.l.b16 %v728
    %v931 = vunpack.c.l.b16 %v729
    %v932 = vunpack.c.l.b16 %v730
    %v933 = vunpack.c.l.b16 %v731
    %v934 = vunpack.c.l.b16 %v732
    %v935 = vunpack.c.l.b16 %v733
    %v936 = vunpack.c.l.b16 %v734
    %v937 = vunpack.c.l.b16 %v735
    %v938 = vunpack.c.l.b16 %v736
    %v939 = vunpack.c.l.b16 %v737
    %v940 = vunpack.c.l.b16 %v738
    %v941 = vpack.c.b16 %v926, %v925
    %v942 = vpack.c.b16 %v928, %v927
    %v943 = vpack.c.b16 %v930, %v929
    %v944 = vpack.c.b16 %v932, %v931
    %v945 = vpack.c.b16 %v934, %v933
    %v946 = vpack.c.b16 %v936, %v935
    %v947 = vpack.c.b16 %v938, %v937
    %v948 = vpack.c.b16 %v940, %v939
    %957 = vmatprep.subr.bf16.mxu0 0
    %958 = vmatpush1.bf16.msra.mxu0 %v941
    %959 = vmatprep.subr.bf16.mxu0 0
    %960 = vmatpush1.bf16.msra.mxu0 %v942
    %961 = vmatprep.subr.bf16.mxu0 0
    %962 = vmatpush1.bf16.msra.mxu0 %v943
    %963 = vmatprep.subr.bf16.mxu0 0
    %964 = vmatpush1.bf16.msra.mxu0 %v944
    %965 = vmatprep.subr.bf16.mxu0 0
    %966 = vmatpush1.bf16.msra.mxu0 %v945
    %967 = vmatprep.subr.bf16.mxu0 0
    %968 = vmatpush1.bf16.msra.mxu0 %v946
    %969 = vmatprep.subr.bf16.mxu0 0
    %970 = vmatpush1.bf16.msra.mxu0 %v947
    %971 = vmatprep.subr.bf16.mxu0 0
    %972 = vmatpush1.bf16.msra.mxu0 %v948
    %973 = vmatprep.subr.bf16.mxu0 0
    %974 = vmatpush1.bf16.msra.mxu0 0
    %975 = vmatprep.subr.bf16.mxu0 0
    %976 = vmatpush1.bf16.msra.mxu0 0
    %977 = vmatprep.subr.bf16.mxu0 0
    %978 = vmatpush1.bf16.msra.mxu0 0
    %979 = vmatprep.subr.bf16.mxu0 0
    %980 = vmatpush1.bf16.msra.mxu0 0
    %981 = vmatprep.subr.bf16.mxu0 0
    %982 = vmatpush1.bf16.msra.mxu0 0
    %983 = vmatprep.subr.bf16.mxu0 0
    %984 = vmatpush1.bf16.msra.mxu0 0
    %985 = vmatprep.subr.bf16.mxu0 0
    %986 = vmatpush1.bf16.msra.mxu0 0
    %987 = vmatprep.subr.bf16.mxu0 0
    %988 = vmatpush1.bf16.msra.mxu0 0
    %989 = vmatprep.mubr.bf16.mxu0 0
    %990 = vmatmul.mubr.bf16.gmra.mrb[0].mxu0 %v907
    %v991 = vpop.f32.mrb[0].mxu0
    %v992 = vadd.f32 %v879, %v991
    %v993 = vpop.f32.mrb[0].mxu0
    %v994 = vpop.f32.mrb[0].mxu0
    %v995 = vpop.f32.mrb[0].mxu0
    %996 = vdwg.mxu0
    %v997 = vld [vmem:[%s3 + $0x1] sm:$0x1]
    %v998 = vlaneseq
    %v999 = vshrl.u32 %v998, 7
    %v1000 = vsub.s32 0, %v999
    %v1001 = vrot.slane %v997, %v1000
    %v1002 = vadd.f32 %v992, %v1001
    %v1003 = vmax.f32 %v1002, 0.0
    %v1004 = vpack.c.bf16 %v1003, %v1003
    %s1005 = scalar_lea.vmem [#allocation2], 192
    %v1006 = vld [vmem:[%s1005] sm:$0xf]
    %v1007 = vld [vmem:[%s1005 + $0x4] sm:$0xf]
    %v1008 = vld [vmem:[%s1005 + $0x8] sm:$0xf]
    %v1009 = vld [vmem:[%s1005 + $0xc] sm:$0xf]
    %v1010 = vld [vmem:[%s1005 + $0x10] sm:$0xf]
    %v1011 = vld [vmem:[%s1005 + $0x14] sm:$0xf]
    %v1012 = vld [vmem:[%s1005 + $0x18] sm:$0xf]
    %v1013 = vld [vmem:[%s1005 + $0x1c] sm:$0xf]
    %v1014 = vld [vmem:[%s1005 + $0x20] sm:$0xf]
    %v1015 = vld [vmem:[%s1005 + $0x24] sm:$0xf]
    %v1016 = vld [vmem:[%s1005 + $0x28] sm:$0xf]
    %v1017 = vld [vmem:[%s1005 + $0x2c] sm:$0xf]
    %v1018 = vld [vmem:[%s1005 + $0x30] sm:$0xf]
    %v1019 = vld [vmem:[%s1005 + $0x34] sm:$0xf]
    %v1020 = vld [vmem:[%s1005 + $0x38] sm:$0xf]
    %v1021 = vld [vmem:[%s1005 + $0x3c] sm:$0xf]
    %v1022 = vld [vmem:[%s3 + $0x2] sm:$0x1]
    %v1023 = vlaneseq
    %v1024 = vshrl.u32 %v1023, 7
    %v1025 = vsub.s32 0, %v1024
    %v1026 = vrot.slane %v1022, %v1025
    %v1043 = vunpack.c.l.b16 %v1006
    %v1044 = vunpack.c.l.b16 %v1007
    %v1045 = vunpack.c.l.b16 %v1008
    %v1046 = vunpack.c.l.b16 %v1009
    %v1047 = vunpack.c.l.b16 %v1010
    %v1048 = vunpack.c.l.b16 %v1011
    %v1049 = vunpack.c.l.b16 %v1012
    %v1050 = vunpack.c.l.b16 %v1013
    %v1051 = vunpack.c.l.b16 %v1014
    %v1052 = vunpack.c.l.b16 %v1015
    %v1053 = vunpack.c.l.b16 %v1016
    %v1054 = vunpack.c.l.b16 %v1017
    %v1055 = vunpack.c.l.b16 %v1018
    %v1056 = vunpack.c.l.b16 %v1019
    %v1057 = vunpack.c.l.b16 %v1020
    %v1058 = vunpack.c.l.b16 %v1021
    %v1059 = vpack.c.b16 %v1044, %v1043
    %v1060 = vpack.c.b16 %v1046, %v1045
    %v1061 = vpack.c.b16 %v1048, %v1047
    %v1062 = vpack.c.b16 %v1050, %v1049
    %v1063 = vpack.c.b16 %v1052, %v1051
    %v1064 = vpack.c.b16 %v1054, %v1053
    %v1065 = vpack.c.b16 %v1056, %v1055
    %v1066 = vpack.c.b16 %v1058, %v1057
    %1075 = vmatprep.subr.bf16.mxu0 0
    %1076 = vmatpush1.bf16.msra.mxu0 %v1059
    %1077 = vmatprep.subr.bf16.mxu0 0
    %1078 = vmatpush1.bf16.msra.mxu0 %v1060
    %1079 = vmatprep.subr.bf16.mxu0 0
    %1080 = vmatpush1.bf16.msra.mxu0 %v1061
    %1081 = vmatprep.subr.bf16.mxu0 0
    %1082 = vmatpush1.bf16.msra.mxu0 %v1062
    %1083 = vmatprep.subr.bf16.mxu0 0
    %1084 = vmatpush1.bf16.msra.mxu0 %v1063
    %1085 = vmatprep.subr.bf16.mxu0 0
    %1086 = vmatpush1.bf16.msra.mxu0 %v1064
    %1087 = vmatprep.subr.bf16.mxu0 0
    %1088 = vmatpush1.bf16.msra.mxu0 %v1065
    %1089 = vmatprep.subr.bf16.mxu0 0
    %1090 = vmatpush1.bf16.msra.mxu0 %v1066
    %1091 = vmatprep.subr.bf16.mxu0 0
    %1092 = vmatpush1.bf16.msra.mxu0 0
    %1093 = vmatprep.subr.bf16.mxu0 0
    %1094 = vmatpush1.bf16.msra.mxu0 0
    %1095 = vmatprep.subr.bf16.mxu0 0
    %1096 = vmatpush1.bf16.msra.mxu0 0
    %1097 = vmatprep.subr.bf16.mxu0 0
    %1098 = vmatpush1.bf16.msra.mxu0 0
    %1099 = vmatprep.subr.bf16.mxu0 0
    %1100 = vmatpush1.bf16.msra.mxu0 0
    %1101 = vmatprep.subr.bf16.mxu0 0
    %1102 = vmatpush1.bf16.msra.mxu0 0
    %1103 = vmatprep.subr.bf16.mxu0 0
    %1104 = vmatpush1.bf16.msra.mxu0 0
    %1105 = vmatprep.subr.bf16.mxu0 0
    %1106 = vmatpush1.bf16.msra.mxu0 0
    %1107 = vmatprep.mubr.bf16.mxu0 0
    %1108 = vmatmul.mubr.bf16.gmra.mrb[0].mxu0 %v1004
    %v1109 = vpop.f32.mrb[0].mxu0
    %v1110 = vadd.f32 %v1026, %v1109
    %v1111 = vpop.f32.mrb[0].mxu0
    %v1112 = vpop.f32.mrb[0].mxu0
    %v1113 = vpop.f32.mrb[0].mxu0
    %1114 = vdwg.mxu0
    %v1115 = vmax.f32 %v1110, 0.0
    %v1116 = vpack.c.bf16 %v1115, %v1115
    %s1117 = scalar_lea.vmem [#allocation2], 256
    %v1118 = vld [vmem:[%s1117] sm:$0xf]
    %v1119 = vld [vmem:[%s1117 + $0x4] sm:$0xf]
    %v1120 = vld [vmem:[%s1117 + $0x8] sm:$0xf]
    %v1121 = vld [vmem:[%s1117 + $0xc] sm:$0xf]
    %v1122 = vld [vmem:[%s1117 + $0x10] sm:$0xf]
    %v1123 = vld [vmem:[%s1117 + $0x14] sm:$0xf]
    %v1124 = vld [vmem:[%s1117 + $0x18] sm:$0xf]
    %v1125 = vld [vmem:[%s1117 + $0x1c] sm:$0xf]
    %v1126 = vld [vmem:[%s1117 + $0x20] sm:$0xf]
    %v1127 = vld [vmem:[%s1117 + $0x24] sm:$0xf]
    %v1128 = vld [vmem:[%s1117 + $0x28] sm:$0xf]
    %v1129 = vld [vmem:[%s1117 + $0x2c] sm:$0xf]
    %v1130 = vld [vmem:[%s1117 + $0x30] sm:$0xf]
    %v1131 = vld [vmem:[%s1117 + $0x34] sm:$0xf]
    %v1132 = vld [vmem:[%s1117 + $0x38] sm:$0xf]
    %v1133 = vld [vmem:[%s1117 + $0x3c] sm:$0xf]
    %v1134 = vld [vmem:[%s3 + $0x3] sm:$0x1]
    %v1135 = vlaneseq
    %v1136 = vshrl.u32 %v1135, 7
    %v1137 = vsub.s32 0, %v1136
    %v1138 = vrot.slane %v1134, %v1137
    %v1155 = vunpack.c.l.b16 %v1118
    %v1156 = vunpack.c.l.b16 %v1119
    %v1157 = vunpack.c.l.b16 %v1120
    %v1158 = vunpack.c.l.b16 %v1121
    %v1159 = vunpack.c.l.b16 %v1122
    %v1160 = vunpack.c.l.b16 %v1123
    %v1161 = vunpack.c.l.b16 %v1124
    %v1162 = vunpack.c.l.b16 %v1125
    %v1163 = vunpack.c.l.b16 %v1126
    %v1164 = vunpack.c.l.b16 %v1127
    %v1165 = vunpack.c.l.b16 %v1128
    %v1166 = vunpack.c.l.b16 %v1129
    %v1167 = vunpack.c.l.b16 %v1130
    %v1168 = vunpack.c.l.b16 %v1131
    %v1169 = vunpack.c.l.b16 %v1132
    %v1170 = vunpack.c.l.b16 %v1133
    %v1171 = vpack.c.b16 %v1156, %v1155
    %v1172 = vpack.c.b16 %v1158, %v1157
    %v1173 = vpack.c.b16 %v1160, %v1159
    %v1174 = vpack.c.b16 %v1162, %v1161
    %v1175 = vpack.c.b16 %v1164, %v1163
    %v1176 = vpack.c.b16 %v1166, %v1165
    %v1177 = vpack.c.b16 %v1168, %v1167
    %v1178 = vpack.c.b16 %v1170, %v1169
    %1187 = vmatprep.subr.bf16.mxu0 0
    %1188 = vmatpush1.bf16.msra.mxu0 %v1171
    %1189 = vmatprep.subr.bf16.mxu0 0
    %1190 = vmatpush1.bf16.msra.mxu0 %v1172
    %1191 = vmatprep.subr.bf16.mxu0 0
    %1192 = vmatpush1.bf16.msra.mxu0 %v1173
    %1193 = vmatprep.subr.bf16.mxu0 0
    %1194 = vmatpush1.bf16.msra.mxu0 %v1174
    %1195 = vmatprep.subr.bf16.mxu0 0
    %1196 = vmatpush1.bf16.msra.mxu0 %v1175
    %1197 = vmatprep.subr.bf16.mxu0 0
    %1198 = vmatpush1.bf16.msra.mxu0 %v1176
    %1199 = vmatprep.subr.bf16.mxu0 0
    %1200 = vmatpush1.bf16.msra.mxu0 %v1177
    %1201 = vmatprep.subr.bf16.mxu0 0
    %1202 = vmatpush1.bf16.msra.mxu0 %v1178
    %1203 = vmatprep.subr.bf16.mxu0 0
    %1204 = vmatpush1.bf16.msra.mxu0 0
    %1205 = vmatprep.subr.bf16.mxu0 0
    %1206 = vmatpush1.bf16.msra.mxu0 0
    %1207 = vmatprep.subr.bf16.mxu0 0
    %1208 = vmatpush1.bf16.msra.mxu0 0
    %1209 = vmatprep.subr.bf16.mxu0 0
    %1210 = vmatpush1.bf16.msra.mxu0 0
    %1211 = vmatprep.subr.bf16.mxu0 0
    %1212 = vmatpush1.bf16.msra.mxu0 0
    %1213 = vmatprep.subr.bf16.mxu0 0
    %1214 = vmatpush1.bf16.msra.mxu0 0
    %1215 = vmatprep.subr.bf16.mxu0 0
    %1216 = vmatpush1.bf16.msra.mxu0 0
    %1217 = vmatprep.subr.bf16.mxu0 0
    %1218 = vmatpush1.bf16.msra.mxu0 0
    %1219 = vmatprep.mubr.bf16.mxu0 0
    %1220 = vmatmul.mubr.bf16.gmra.mrb[0].mxu0 %v1116
    %v1221 = vpop.f32.mrb[0].mxu0
    %v1222 = vadd.f32 %v1138, %v1221
    %v1223 = vpop.f32.mrb[0].mxu0
    %v1224 = vpop.f32.mrb[0].mxu0
    %v1225 = vpop.f32.mrb[0].mxu0
    %1226 = vdwg.mxu0
    %v1227 = vmax.f32 %v1222, 0.0
    %v1228 = vpack.c.bf16 %v1227, %v1227
    %s1229 = scalar_lea.vmem [#allocation2], 320
    %v1230 = vld [vmem:[%s1229] sm:$0xf]
    %v1231 = vld [vmem:[%s1229 + $0x4] sm:$0xf]
    %v1232 = vld [vmem:[%s1229 + $0x8] sm:$0xf]
    %v1233 = vld [vmem:[%s1229 + $0xc] sm:$0xf]
    %v1234 = vld [vmem:[%s1229 + $0x10] sm:$0xf]
    %v1235 = vld [vmem:[%s1229 + $0x14] sm:$0xf]
    %v1236 = vld [vmem:[%s1229 + $0x18] sm:$0xf]
    %v1237 = vld [vmem:[%s1229 + $0x1c] sm:$0xf]
    %v1238 = vld [vmem:[%s1229 + $0x20] sm:$0xf]
    %v1239 = vld [vmem:[%s1229 + $0x24] sm:$0xf]
    %v1240 = vld [vmem:[%s1229 + $0x28] sm:$0xf]
    %v1241 = vld [vmem:[%s1229 + $0x2c] sm:$0xf]
    %v1242 = vld [vmem:[%s1229 + $0x30] sm:$0xf]
    %v1243 = vld [vmem:[%s1229 + $0x34] sm:$0xf]
    %v1244 = vld [vmem:[%s1229 + $0x38] sm:$0xf]
    %v1245 = vld [vmem:[%s1229 + $0x3c] sm:$0xf]
    %v1246 = vld [vmem:[%s3 + $0x4] sm:$0x1]
    %v1247 = vlaneseq
    %v1248 = vshrl.u32 %v1247, 7
    %v1249 = vsub.s32 0, %v1248
    %v1250 = vrot.slane %v1246, %v1249
    %v1267 = vunpack.c.l.b16 %v1230
    %v1268 = vunpack.c.l.b16 %v1231
    %v1269 = vunpack.c.l.b16 %v1232
    %v1270 = vunpack.c.l.b16 %v1233
    %v1271 = vunpack.c.l.b16 %v1234
    %v1272 = vunpack.c.l.b16 %v1235
    %v1273 = vunpack.c.l.b16 %v1236
    %v1274 = vunpack.c.l.b16 %v1237
    %v1275 = vunpack.c.l.b16 %v1238
    %v1276 = vunpack.c.l.b16 %v1239
    %v1277 = vunpack.c.l.b16 %v1240
    %v1278 = vunpack.c.l.b16 %v1241
    %v1279 = vunpack.c.l.b16 %v1242
    %v1280 = vunpack.c.l.b16 %v1243
    %v1281 = vunpack.c.l.b16 %v1244
    %v1282 = vunpack.c.l.b16 %v1245
    %v1283 = vpack.c.b16 %v1268, %v1267
    %v1284 = vpack.c.b16 %v1270, %v1269
    %v1285 = vpack.c.b16 %v1272, %v1271
    %v1286 = vpack.c.b16 %v1274, %v1273
    %v1287 = vpack.c.b16 %v1276, %v1275
    %v1288 = vpack.c.b16 %v1278, %v1277
    %v1289 = vpack.c.b16 %v1280, %v1279
    %v1290 = vpack.c.b16 %v1282, %v1281
    %1299 = vmatprep.subr.bf16.mxu0 0
    %1300 = vmatpush1.bf16.msra.mxu0 %v1283
    %1301 = vmatprep.subr.bf16.mxu0 0
    %1302 = vmatpush1.bf16.msra.mxu0 %v1284
    %1303 = vmatprep.subr.bf16.mxu0 0
    %1304 = vmatpush1.bf16.msra.mxu0 %v1285
    %1305 = vmatprep.subr.bf16.mxu0 0
    %1306 = vmatpush1.bf16.msra.mxu0 %v1286
    %1307 = vmatprep.subr.bf16.mxu0 0
    %1308 = vmatpush1.bf16.msra.mxu0 %v1287
    %1309 = vmatprep.subr.bf16.mxu0 0
    %1310 = vmatpush1.bf16.msra.mxu0 %v1288
    %1311 = vmatprep.subr.bf16.mxu0 0
    %1312 = vmatpush1.bf16.msra.mxu0 %v1289
    %1313 = vmatprep.subr.bf16.mxu0 0
    %1314 = vmatpush1.bf16.msra.mxu0 %v1290
    %1315 = vmatprep.subr.bf16.mxu0 0
    %1316 = vmatpush1.bf16.msra.mxu0 0
    %1317 = vmatprep.subr.bf16.mxu0 0
    %1318 = vmatpush1.bf16.msra.mxu0 0
    %1319 = vmatprep.subr.bf16.mxu0 0
    %1320 = vmatpush1.bf16.msra.mxu0 0
    %1321 = vmatprep.subr.bf16.mxu0 0
    %1322 = vmatpush1.bf16.msra.mxu0 0
    %1323 = vmatprep.subr.bf16.mxu0 0
    %1324 = vmatpush1.bf16.msra.mxu0 0
    %1325 = vmatprep.subr.bf16.mxu0 0
    %1326 = vmatpush1.bf16.msra.mxu0 0
    %1327 = vmatprep.subr.bf16.mxu0 0
    %1328 = vmatpush1.bf16.msra.mxu0 0
    %1329 = vmatprep.subr.bf16.mxu0 0
    %1330 = vmatpush1.bf16.msra.mxu0 0
    %1331 = vmatprep.mubr.bf16.mxu0 0
    %1332 = vmatmul.mubr.bf16.gmra.mrb[0].mxu0 %v1228
    %v1333 = vpop.f32.mrb[0].mxu0
    %v1334 = vadd.f32 %v1250, %v1333
    %v1335 = vpop.f32.mrb[0].mxu0
    %v1336 = vpop.f32.mrb[0].mxu0
    %v1337 = vpop.f32.mrb[0].mxu0
    %1338 = vdwg.mxu0
    %1339 = vmax.xlane.f32.xlu0 %v1334
    %v1340 = vpop.xlane.xlu0 %1339
    %v1341 = vsub.f32 %v1334, %v1340
    %v1342 = vmul.f32 %v1341, 1.442695
    %v1343 = vpow.pop %v1342
    %1344 = vadd.xlane.f32.xlu0 %v1343
    %v1345 = vpop.xlane.xlu0 %1344
    %v1346 = vlog2.pop %v1345
    %v1347 = vmul.f32 %v1346, 0.6931472
    %v1348 = vadd.f32 %v1347, %v1340
    %v1349 = vsub.f32 %v1334, %v1348
    %1350 = vst [vmem:[#allocation5] sm:$0xff] %v1349
    // Predicated region
    $region22: #{tpu_custom_call.1} parent=1 // pred_check
      _
    $region23: #{tpu_custom_call.1} parent=1 // pred_check_branch
      %1352 = sbr.rel (0) target = $region25
    $region24: #{tpu_custom_call.1} parent=1 // pred_region
      %s1354 = ssub.s32 128, 128
      %1355 = vsyncadd [#allocation4], %s1354
      %s1357 = sshll.u32 [#allocation5], 4
      %s1358 = int_to_ptr.vmem [resolvable:$true] %s1357
      %1360 = dma.vmem_to_hbm [thread:$0]  %s1358, 128, %s4, [#allocation4]
    $region25: #{tpu_custom_call.1} parent=1 // pred_fallthru
      _
    // Predicated region
    $region26: #{tpu_custom_call.1} parent=1 // pred_check
      _
    $region27: #{tpu_custom_call.1} parent=1 // pred_check_branch
      %1362 = sbr.rel (0) target = $region29
    $region28: #{tpu_custom_call.1} parent=1 // pred_region
      %1363 = dma.done [#allocation4], 128
    $region29: #{tpu_custom_call.1} parent=1 // pred_fallthru
      _
    %1364 = vsyncpa [#allocation3], 1
    %1365 = vsyncpa [#allocation4], 1

</llo_original>
